<compile_context>
chip_gen: v7x
topology: tpu7x:2x2x1
jax: 0.10.0
libtpu: 0.0.40
codegen_flags: <defaults>
</compile_context>

<pallas_src>
import functools

import jax
import jax.numpy as jnp
from jax import lax
from jax.experimental import pallas as pl
from jax.experimental.pallas import tpu as pltpu

_HALO = 8  # sublane-aligned halo block height (min block rows for f32)


def _sobel_kernel(x_ref, top_ref, bot_ref, xv_ref, xh_ref, mag_ref, *, H):
    # x_ref:   (1, TH, W)  main row tile (last tile may be ragged: rows >= H are garbage)
    # top_ref: (1, 8,  W)  8-row block whose LAST row is the row above the tile
    # bot_ref: (1, 8,  W)  8-row block whose FIRST row is the row below the tile
    i = pl.program_id(1)
    _, TH, W = xv_ref.shape
    dt = xv_ref.dtype

    x = x_ref[0]  # (TH, W)

    # Only the single halo row that is actually consumed (perf-review item):
    # scale the top row to zero on the first tile to reproduce conv2d's zero pad.
    top_scale = (i > 0).astype(dt)
    top_row = top_ref[0, _HALO - 1:_HALO, :] * top_scale  # (1, W)
    bot_row = bot_ref[0, 0:1, :]                           # (1, W) (bottom edge handled below)

    def hpass(a):
        # Horizontal 1-D pass with zero padding: XLU rolls + lane masks
        # (no padded scratch, no lane-misaligned slices).
        w = a.shape[-1]
        ax = a.ndim - 1
        left = pltpu.roll(a, 1, axis=ax)        # left[c]  = a[c-1]  (wraps at c=0)
        right = pltpu.roll(a, w - 1, axis=ax)   # right[c] = a[c+1]  (wraps at c=W-1)
        col = lax.broadcasted_iota(jnp.int32, a.shape, ax)
        left = jnp.where(col > 0, left, 0.0)
        right = jnp.where(col < w - 1, right, 0.0)
        return left + 2.0 * a + right, right - left   # s, d

    s, d = hpass(x)
    s_top, d_top = hpass(top_row)
    s_bot, d_bot = hpass(bot_row)

    # Vertical (sublane) combine: roll within the tile, patch the wrapped rows
    # with the halo rows, and zero the below-image contribution (this also
    # makes the ragged last tile correct).
    row = lax.broadcasted_iota(jnp.int32, (TH, W), 0)
    g_row = row + i * TH                      # global image row of each tile row
    first_local = row == 0
    last_local = row == TH - 1
    below_valid = g_row < (H - 1)             # an image row exists below this one

    s_up = jnp.where(first_local, s_top, pltpu.roll(s, 1, axis=0))
    d_up = jnp.where(first_local, d_top, pltpu.roll(d, 1, axis=0))
    s_dn = jnp.where(last_local, s_bot, pltpu.roll(s, TH - 1, axis=0))
    d_dn = jnp.where(last_local, d_bot, pltpu.roll(d, TH - 1, axis=0))
    s_dn = jnp.where(below_valid, s_dn, 0.0)
    d_dn = jnp.where(below_valid, d_dn, 0.0)

    xv = s_dn - s_up
    xh = d_up + 2.0 * d + d_dn
    xv_ref[0] = xv
    xh_ref[0] = xh
    mag_ref[0] = jnp.sqrt(xv * xv + xh * xh + 1e-6)


def _vmem_limit_bytes():
    """Generation-aware VMEM limit: ~96 MiB on 128 MiB parts (v5e/v6e),
    ~48 MiB on v7x's 64 MiB per-core VMEM."""
    cap = 64 * 1024 * 1024  # conservative default
    try:
        cap = int(getattr(pltpu.get_tpu_info(), "vmem_capacity_bytes", cap))
    except Exception:
        pass
    return min((cap * 3) // 4, 100 * 1024 * 1024)


def _choose_row_tile(B, H, W, itemsize, budget_bytes, *, min_steps=4, max_tile=512):
    """Largest row tile (multiple of 8, <= 512) whose per-step working set fits
    the budget, further capped so the grid has at least `min_steps` steps."""
    def work(th):
        # rows of W*itemsize each, per grid step:
        #   main input (2 bufs): 2*th     halo blocks (2 x 2 bufs): 32
        #   outputs (3 x 2 bufs): 6*th    live in-kernel temporaries: ~8*th
        return itemsize * W * (16 * th + 4 * _HALO)

    cap = min(max_tile, max(8, pl.cdiv(H, 8) * 8))
    th = 8
    for cand in range(8, cap + 1, 8):
        if work(cand) <= budget_bytes:
            th = cand

    # Keep at least min_steps total grid steps (pipeline overlap + v7x 2nd core).
    n_target = max(1, -(-min_steps // B))
    n_target = min(n_target, pl.cdiv(H, 8))
    th_steps = max(8, (H // n_target) // 8 * 8)
    return min(th, th_steps)


def _sobel_jax_fallback(x2):
    # Fused pure-JAX path for narrow / non-lane-aligned widths and non-f32 inputs.
    xp = jnp.pad(x2, ((0, 0), (1, 1), (1, 1)))
    s = xp[:, :, :-2] + 2.0 * xp[:, :, 1:-1] + xp[:, :, 2:]
    d = xp[:, :, 2:] - xp[:, :, :-2]
    xv = s[:, 2:, :] - s[:, :-2, :]
    xh = d[:, :-2, :] + 2.0 * d[:, 1:-1, :] + d[:, 2:, :]
    mag = jnp.sqrt(xv * xv + xh * xh + 1e-6)
    return xv, xh, mag


def sobel_forward(x, *, row_tile=None, min_steps=4):
    """x: (B, 1, H, W) NCHW, C=1 (Sobel weights are [1,1,3,3]).
    Returns (x_v, x_h, magnitude), each (B, 1, H, W)."""
    assert x.ndim == 4 and x.shape[1] == 1, "Sobel weights are [1,1,3,3]; expect C=1"
    B, _, H, W = x.shape
    dt = x.dtype
    x2 = x[:, 0, :, :]  # (B, H, W)

    # Lane-dense Pallas path only for f32 and W a multiple of 128; otherwise a
    # fused XLA graph beats masked (vst.msk) stores.
    if dt != jnp.float32 or W % 128 != 0 or H < 1:
        xv, xh, mag = _sobel_jax_fallback(x2)
        return xv[:, None, :, :], xh[:, None, :, :], mag[:, None, :, :]

    vmem_limit = _vmem_limit_bytes()
    if row_tile is None:
        TH = _choose_row_tile(B, H, W, dt.itemsize, int(vmem_limit * 0.8),
                              min_steps=min_steps)
    else:
        TH = int(row_tile)
        assert TH >= 8 and TH % 8 == 0, "row_tile must be a multiple of 8"

    nH = pl.cdiv(H, TH)          # ragged last tile allowed
    ratio = TH // _HALO
    n_hblk = pl.cdiv(H, _HALO)   # number of 8-row halo blocks along H

    out_sds = jax.ShapeDtypeStruct((B, H, W), dt)
    main_spec = pl.BlockSpec((1, TH, W), lambda b, i: (b, i, 0))
    top_spec = pl.BlockSpec(
        (1, _HALO, W), lambda b, i: (b, jnp.maximum(i * ratio - 1, 0), 0))
    bot_spec = pl.BlockSpec(
        (1, _HALO, W), lambda b, i: (b, jnp.minimum((i + 1) * ratio, n_hblk - 1), 0))
    out_spec = pl.BlockSpec((1, TH, W), lambda b, i: (b, i, 0))

    xv, xh, mag = pl.pallas_call(
        functools.partial(_sobel_kernel, H=H),
        out_shape=(out_sds, out_sds, out_sds),
        grid_spec=pltpu.PrefetchScalarGridSpec(
            num_scalar_prefetch=0,
            grid=(B, nH),
            in_specs=[main_spec, top_spec, bot_spec],
            out_specs=[out_spec, out_spec, out_spec],
        ),
        compiler_params=pltpu.CompilerParams(
            dimension_semantics=("parallel", "parallel"),
            vmem_limit_bytes=vmem_limit,
        ),
    )(x2, x2, x2)

    # TODO(synk): outputs kept as three separate f32 arrays to match the module's
    # return signature; a stacked / bf16 output variant would cut HBM writes further.
    return xv[:, None, :, :], xh[:, None, :, :], mag[:, None, :, :]


if __name__ == "__main__":
    kv = jnp.array([[-1., -2., -1.], [0., 0., 0.], [1., 2., 1.]], jnp.float32)
    kh = jnp.array([[-1., 0., 1.], [-2., 0., 2.], [-1., 0., 1.]], jnp.float32)

    def ref_conv(img, k):
        return jax.lax.conv_general_dilated(
            img, k[None, None, :, :], window_strides=(1, 1), padding="SAME",
            dimension_numbers=("NCHW", "OIHW", "NCHW"))

    def check(x, **kw):
        xv, xh, mag = sobel_forward(x, **kw)
        jax.block_until_ready((xv, xh, mag))
        xv_r = ref_conv(x, kv)
        xh_r = ref_conv(x, kh)
        mag_r = jnp.sqrt(xv_r ** 2 + xh_r ** 2 + 1e-6)
        assert xv.shape == x.shape and xh.shape == x.shape and mag.shape == x.shape
        assert jnp.allclose(xv, xv_r, atol=1e-4), "x_v mismatch"
        assert jnp.allclose(xh, xh_r, atol=1e-4), "x_h mismatch"
        assert jnp.allclose(mag, mag_r, atol=1e-4), "magnitude mismatch"

    key = jax.random.PRNGKey(0)
    k1, k2, k3 = jax.random.split(key, 3)

    # W=16 < 128: routed to the fused JAX fallback (lane-dense-output rule).
    check(jax.random.normal(k1, (2, 1, 16, 16), dtype=jnp.float32))
    # Lane-dense Pallas path: W=128, chooser picks TH=16 -> grid (2, 2).
    check(jax.random.normal(k2, (2, 1, 32, 128), dtype=jnp.float32))
    # Ragged last row tile: H=24 with forced TH=16 (tiles of 16 + 8 valid rows).
    check(jax.random.normal(k3, (1, 1, 24, 128), dtype=jnp.float32), row_tile=16)

    print("KERNEL_OK")
</pallas_src>

<mosaic_0001>
module attributes {stable_mosaic.version = 11 : i64} {
  func.func @_sobel_kernel(%arg0: i32, %arg1: i32, %arg2: memref<1x16x128xf32, #tpu.memory_space<vmem>>, %arg3: memref<1x8x128xf32, #tpu.memory_space<vmem>>, %arg4: memref<1x8x128xf32, #tpu.memory_space<vmem>>, %arg5: memref<1x16x128xf32, #tpu.memory_space<vmem>>, %arg6: memref<1x16x128xf32, #tpu.memory_space<vmem>>, %arg7: memref<1x16x128xf32, #tpu.memory_space<vmem>>) attributes {dimension_semantics = [#tpu.dimension_semantics<parallel>, #tpu.dimension_semantics<parallel>], iteration_bounds = array<i64: 2, 2>, scalar_prefetch = 0 : i64, scratch_operands = 0 : i64, tpu.core_type = #tpu.core_type<tc>, window_params = [{transform_indices = @transform_0, window_bounds = array<i64: 1, 16, 128>}, {transform_indices = @transform_1, window_bounds = array<i64: 1, 8, 128>}, {transform_indices = @transform_2, window_bounds = array<i64: 1, 8, 128>}, {transform_indices = @transform_3, window_bounds = array<i64: 1, 16, 128>}, {transform_indices = @transform_4, window_bounds = array<i64: 1, 16, 128>}, {transform_indices = @transform_5, window_bounds = array<i64: 1, 16, 128>}]} {
    %c0 = arith.constant 0 : index
    %c0_0 = arith.constant 0 : index
    %c0_1 = arith.constant 0 : index
    %0 = vector.load %arg2[%c0, %c0_0, %c0_1] : memref<1x16x128xf32, #tpu.memory_space<vmem>>, vector<1x16x128xf32>
    %1 = vector.shape_cast %0 : vector<1x16x128xf32> to vector<16x128xf32>
    %c0_i32 = arith.constant 0 : i32
    %2 = arith.cmpi sgt, %arg1, %c0_i32 : i32
    %3 = arith.extui %2 : i1 to i32
    %4 = arith.sitofp %3 : i32 to f32
    %c0_2 = arith.constant 0 : index
    %c7 = arith.constant 7 : index
    %c0_3 = arith.constant 0 : index
    %5 = vector.load %arg3[%c0_2, %c7, %c0_3] : memref<1x8x128xf32, #tpu.memory_space<vmem>>, vector<1x1x128xf32>
    %6 = vector.shape_cast %5 : vector<1x1x128xf32> to vector<1x128xf32>
    %7 = vector.broadcast %4 : f32 to vector<1x128xf32>
    %8 = arith.mulf %6, %7 : vector<1x128xf32>
    %c0_4 = arith.constant 0 : index
    %c0_5 = arith.constant 0 : index
    %c0_6 = arith.constant 0 : index
    %9 = vector.load %arg4[%c0_4, %c0_5, %c0_6] : memref<1x8x128xf32, #tpu.memory_space<vmem>>, vector<1x1x128xf32>
    %10 = vector.shape_cast %9 : vector<1x1x128xf32> to vector<1x128xf32>
    %c1_i32 = arith.constant 1 : i32
    %11 = tpu.dynamic_rotate %1 by %c1_i32 dim 1 : vector<16x128xf32>, i32 -> vector<16x128xf32>
    %c127_i32 = arith.constant 127 : i32
    %12 = tpu.dynamic_rotate %1 by %c127_i32 dim 1 : vector<16x128xf32>, i32 -> vector<16x128xf32>
    %13 = tpu.iota {dimensions = array<i32: 1>} : vector<16x128xi32>
    %c0_i32_7 = arith.constant 0 : i32
    %14 = vector.broadcast %c0_i32_7 : i32 to vector<16x128xi32>
    %15 = arith.cmpi sgt, %13, %14 : vector<16x128xi32>
    %cst = arith.constant 0.000000e+00 : f32
    %16 = vector.broadcast %cst : f32 to vector<16x128xf32>
    %17 = arith.select %15, %11, %16 : vector<16x128xi1>, vector<16x128xf32>
    %c127_i32_8 = arith.constant 127 : i32
    %18 = vector.broadcast %c127_i32_8 : i32 to vector<16x128xi32>
    %19 = arith.cmpi slt, %13, %18 : vector<16x128xi32>
    %cst_9 = arith.constant 0.000000e+00 : f32
    %20 = vector.broadcast %cst_9 : f32 to vector<16x128xf32>
    %21 = arith.select %19, %12, %20 : vector<16x128xi1>, vector<16x128xf32>
    %cst_10 = arith.constant 2.000000e+00 : f32
    %22 = vector.broadcast %cst_10 : f32 to vector<16x128xf32>
    %23 = arith.mulf %22, %1 : vector<16x128xf32>
    %24 = arith.addf %17, %23 : vector<16x128xf32>
    %25 = arith.addf %24, %21 : vector<16x128xf32>
    %26 = arith.subf %21, %17 : vector<16x128xf32>
    %c1_i32_11 = arith.constant 1 : i32
    %27 = tpu.dynamic_rotate %8 by %c1_i32_11 dim 1 : vector<1x128xf32>, i32 -> vector<1x128xf32>
    %c127_i32_12 = arith.constant 127 : i32
    %28 = tpu.dynamic_rotate %8 by %c127_i32_12 dim 1 : vector<1x128xf32>, i32 -> vector<1x128xf32>
    %29 = tpu.iota {dimensions = array<i32: 1>} : vector<1x128xi32>
    %c0_i32_13 = arith.constant 0 : i32
    %30 = vector.broadcast %c0_i32_13 : i32 to vector<1x128xi32>
    %31 = arith.cmpi sgt, %29, %30 : vector<1x128xi32>
    %cst_14 = arith.constant 0.000000e+00 : f32
    %32 = vector.broadcast %cst_14 : f32 to vector<1x128xf32>
    %33 = arith.select %31, %27, %32 : vector<1x128xi1>, vector<1x128xf32>
    %c127_i32_15 = arith.constant 127 : i32
    %34 = vector.broadcast %c127_i32_15 : i32 to vector<1x128xi32>
    %35 = arith.cmpi slt, %29, %34 : vector<1x128xi32>
    %cst_16 = arith.constant 0.000000e+00 : f32
    %36 = vector.broadcast %cst_16 : f32 to vector<1x128xf32>
    %37 = arith.select %35, %28, %36 : vector<1x128xi1>, vector<1x128xf32>
    %cst_17 = arith.constant 2.000000e+00 : f32
    %38 = vector.broadcast %cst_17 : f32 to vector<1x128xf32>
    %39 = arith.mulf %38, %8 : vector<1x128xf32>
    %40 = arith.addf %33, %39 : vector<1x128xf32>
    %41 = arith.addf %40, %37 : vector<1x128xf32>
    %42 = arith.subf %37, %33 : vector<1x128xf32>
    %c1_i32_18 = arith.constant 1 : i32
    %43 = tpu.dynamic_rotate %10 by %c1_i32_18 dim 1 : vector<1x128xf32>, i32 -> vector<1x128xf32>
    %c127_i32_19 = arith.constant 127 : i32
    %44 = tpu.dynamic_rotate %10 by %c127_i32_19 dim 1 : vector<1x128xf32>, i32 -> vector<1x128xf32>
    %45 = tpu.iota {dimensions = array<i32: 1>} : vector<1x128xi32>
    %c0_i32_20 = arith.constant 0 : i32
    %46 = vector.broadcast %c0_i32_20 : i32 to vector<1x128xi32>
    %47 = arith.cmpi sgt, %45, %46 : vector<1x128xi32>
    %cst_21 = arith.constant 0.000000e+00 : f32
    %48 = vector.broadcast %cst_21 : f32 to vector<1x128xf32>
    %49 = arith.select %47, %43, %48 : vector<1x128xi1>, vector<1x128xf32>
    %c127_i32_22 = arith.constant 127 : i32
    %50 = vector.broadcast %c127_i32_22 : i32 to vector<1x128xi32>
    %51 = arith.cmpi slt, %45, %50 : vector<1x128xi32>
    %cst_23 = arith.constant 0.000000e+00 : f32
    %52 = vector.broadcast %cst_23 : f32 to vector<1x128xf32>
    %53 = arith.select %51, %44, %52 : vector<1x128xi1>, vector<1x128xf32>
    %cst_24 = arith.constant 2.000000e+00 : f32
    %54 = vector.broadcast %cst_24 : f32 to vector<1x128xf32>
    %55 = arith.mulf %54, %10 : vector<1x128xf32>
    %56 = arith.addf %49, %55 : vector<1x128xf32>
    %57 = arith.addf %56, %53 : vector<1x128xf32>
    %58 = arith.subf %53, %49 : vector<1x128xf32>
    %59 = tpu.iota {dimensions = array<i32: 0>} : vector<16x128xi32>
    %c16_i32 = arith.constant 16 : i32
    %60 = arith.muli %arg1, %c16_i32 : i32
    %61 = vector.broadcast %60 : i32 to vector<16x128xi32>
    %62 = arith.addi %59, %61 : vector<16x128xi32>
    %c0_i32_25 = arith.constant 0 : i32
    %63 = vector.broadcast %c0_i32_25 : i32 to vector<16x128xi32>
    %64 = arith.cmpi eq, %59, %63 : vector<16x128xi32>
    %c15_i32 = arith.constant 15 : i32
    %65 = vector.broadcast %c15_i32 : i32 to vector<16x128xi32>
    %66 = arith.cmpi eq, %59, %65 : vector<16x128xi32>
    %c31_i32 = arith.constant 31 : i32
    %67 = vector.broadcast %c31_i32 : i32 to vector<16x128xi32>
    %68 = arith.cmpi slt, %62, %67 : vector<16x128xi32>
    %c1_i32_26 = arith.constant 1 : i32
    %69 = tpu.dynamic_rotate %25 by %c1_i32_26 dim 0 : vector<16x128xf32>, i32 -> vector<16x128xf32>
    %70 = vector.shape_cast %41 : vector<1x128xf32> to vector<1x128xf32>
    %71 = vector.broadcast %70 : vector<1x128xf32> to vector<16x128xf32>
    %72 = arith.select %64, %71, %69 : vector<16x128xi1>, vector<16x128xf32>
    %c1_i32_27 = arith.constant 1 : i32
    %73 = tpu.dynamic_rotate %26 by %c1_i32_27 dim 0 : vector<16x128xf32>, i32 -> vector<16x128xf32>
    %74 = vector.shape_cast %42 : vector<1x128xf32> to vector<1x128xf32>
    %75 = vector.broadcast %74 : vector<1x128xf32> to vector<16x128xf32>
    %76 = arith.select %64, %75, %73 : vector<16x128xi1>, vector<16x128xf32>
    %c15_i32_28 = arith.constant 15 : i32
    %77 = tpu.dynamic_rotate %25 by %c15_i32_28 dim 0 : vector<16x128xf32>, i32 -> vector<16x128xf32>
    %78 = vector.shape_cast %57 : vector<1x128xf32> to vector<1x128xf32>
    %79 = vector.broadcast %78 : vector<1x128xf32> to vector<16x128xf32>
    %80 = arith.select %66, %79, %77 : vector<16x128xi1>, vector<16x128xf32>
    %c15_i32_29 = arith.constant 15 : i32
    %81 = tpu.dynamic_rotate %26 by %c15_i32_29 dim 0 : vector<16x128xf32>, i32 -> vector<16x128xf32>
    %82 = vector.shape_cast %58 : vector<1x128xf32> to vector<1x128xf32>
    %83 = vector.broadcast %82 : vector<1x128xf32> to vector<16x128xf32>
    %84 = arith.select %66, %83, %81 : vector<16x128xi1>, vector<16x128xf32>
    %cst_30 = arith.constant 0.000000e+00 : f32
    %85 = vector.broadcast %cst_30 : f32 to vector<16x128xf32>
    %86 = arith.select %68, %80, %85 : vector<16x128xi1>, vector<16x128xf32>
    %cst_31 = arith.constant 0.000000e+00 : f32
    %87 = vector.broadcast %cst_31 : f32 to vector<16x128xf32>
    %88 = arith.select %68, %84, %87 : vector<16x128xi1>, vector<16x128xf32>
    %89 = arith.subf %86, %72 : vector<16x128xf32>
    %cst_32 = arith.constant 2.000000e+00 : f32
    %90 = vector.broadcast %cst_32 : f32 to vector<16x128xf32>
    %91 = arith.mulf %90, %26 : vector<16x128xf32>
    %92 = arith.addf %76, %91 : vector<16x128xf32>
    %93 = arith.addf %92, %88 : vector<16x128xf32>
    %c0_33 = arith.constant 0 : index
    %c0_34 = arith.constant 0 : index
    %c0_35 = arith.constant 0 : index
    %94 = vector.load %arg5[%c0_33, %c0_34, %c0_35] : memref<1x16x128xf32, #tpu.memory_space<vmem>>, vector<1x16x128xf32>
    %95 = vector.shape_cast %94 : vector<1x16x128xf32> to vector<16x128xf32>
    %96 = vector.shape_cast %89 : vector<16x128xf32> to vector<1x16x128xf32>
    tpu.vector_store %arg5[%c0_33, %c0_34, %c0_35], %96 {strides = array<i32>} : memref<1x16x128xf32, #tpu.memory_space<vmem>>, vector<1x16x128xf32>,
    %c0_36 = arith.constant 0 : index
    %c0_37 = arith.constant 0 : index
    %c0_38 = arith.constant 0 : index
    %97 = vector.load %arg6[%c0_36, %c0_37, %c0_38] : memref<1x16x128xf32, #tpu.memory_space<vmem>>, vector<1x16x128xf32>
    %98 = vector.shape_cast %97 : vector<1x16x128xf32> to vector<16x128xf32>
    %99 = vector.shape_cast %93 : vector<16x128xf32> to vector<1x16x128xf32>
    tpu.vector_store %arg6[%c0_36, %c0_37, %c0_38], %99 {strides = array<i32>} : memref<1x16x128xf32, #tpu.memory_space<vmem>>, vector<1x16x128xf32>,
    %100 = arith.mulf %89, %89 : vector<16x128xf32>
    %101 = arith.mulf %93, %93 : vector<16x128xf32>
    %102 = arith.addf %100, %101 : vector<16x128xf32>
    %cst_39 = arith.constant 9.99999997E-7 : f32
    %103 = vector.broadcast %cst_39 : f32 to vector<16x128xf32>
    %104 = arith.addf %102, %103 : vector<16x128xf32>
    %105 = math.sqrt %104 : vector<16x128xf32>
    %c0_40 = arith.constant 0 : index
    %c0_41 = arith.constant 0 : index
    %c0_42 = arith.constant 0 : index
    %106 = vector.load %arg7[%c0_40, %c0_41, %c0_42] : memref<1x16x128xf32, #tpu.memory_space<vmem>>, vector<1x16x128xf32>
    %107 = vector.shape_cast %106 : vector<1x16x128xf32> to vector<16x128xf32>
    %108 = vector.shape_cast %105 : vector<16x128xf32> to vector<1x16x128xf32>
    tpu.vector_store %arg7[%c0_40, %c0_41, %c0_42], %108 {strides = array<i32>} : memref<1x16x128xf32, #tpu.memory_space<vmem>>, vector<1x16x128xf32>,
    return
  }
  func.func @transform_0(%arg0: i32, %arg1: i32) -> (i32, i32, i32) {
    %c0_i32 = arith.constant 0 : i32
    %c0_i32_0 = arith.constant 0 : i32
    return %arg0, %arg1, %c0_i32 : i32, i32, i32
  }
  func.func @transform_1(%arg0: i32, %arg1: i32) -> (i32, i32, i32) {
    %c2_i32 = arith.constant 2 : i32
    %0 = arith.muli %arg1, %c2_i32 : i32
    %c1_i32 = arith.constant 1 : i32
    %1 = arith.subi %0, %c1_i32 : i32
    %c0_i32 = arith.constant 0 : i32
    %2 = arith.maxsi %1, %c0_i32 : i32
    %c0_i32_0 = arith.constant 0 : i32
    %c0_i32_1 = arith.constant 0 : i32
    return %arg0, %2, %c0_i32_0 : i32, i32, i32
  }
  func.func @transform_2(%arg0: i32, %arg1: i32) -> (i32, i32, i32) {
    %c1_i32 = arith.constant 1 : i32
    %0 = arith.addi %arg1, %c1_i32 : i32
    %c2_i32 = arith.constant 2 : i32
    %1 = arith.muli %0, %c2_i32 : i32
    %c3_i32 = arith.constant 3 : i32
    %2 = arith.minsi %1, %c3_i32 : i32
    %c0_i32 = arith.constant 0 : i32
    %c0_i32_0 = arith.constant 0 : i32
    return %arg0, %2, %c0_i32 : i32, i32, i32
  }
  func.func @transform_3(%arg0: i32, %arg1: i32) -> (i32, i32, i32) {
    %c0_i32 = arith.constant 0 : i32
    %c0_i32_0 = arith.constant 0 : i32
    return %arg0, %arg1, %c0_i32 : i32, i32, i32
  }
  func.func @transform_4(%arg0: i32, %arg1: i32) -> (i32, i32, i32) {
    %c0_i32 = arith.constant 0 : i32
    %c0_i32_0 = arith.constant 0 : i32
    return %arg0, %arg1, %c0_i32 : i32, i32, i32
  }
  func.func @transform_5(%arg0: i32, %arg1: i32) -> (i32, i32, i32) {
    %c0_i32 = arith.constant 0 : i32
    %c0_i32_0 = arith.constant 0 : i32
    return %arg0, %arg1, %c0_i32 : i32, i32, i32
  }
}

</mosaic_0001>

<llo_original>
// kernel: tpu_custom_call.1
$region0: #{tpu_custom_call.1}
  #allocation0 [shape = 'u32[]', space=smem, size = 0x4, offset = 0x4, fixed_abs, tag = 'smem constant byte address 0x4 - core index']
  #allocation1 [shape = 'u32[144,128]{1,0:T(1,128)}', space=vmem, size = 0x12000, scoped, tag = 'internal scratch']
  %s0 = inlined_call_operand.hbm [shape: f32[2,32,128], index: 0, kind: input, shape index: {}]
  %s1 = inlined_call_operand.hbm [shape: f32[2,32,128], index: 1, kind: input, shape index: {}]
  %s2 = inlined_call_operand.hbm [shape: f32[2,32,128], index: 2, kind: input, shape index: {}]
  %s3 = inlined_call_operand.hbm [shape: f32[2,32,128], index: 3, kind: output, shape index: {0}]
  %s4 = inlined_call_operand.hbm [shape: f32[2,32,128], index: 4, kind: output, shape index: {1}]
  %s5 = inlined_call_operand.hbm [shape: f32[2,32,128], index: 5, kind: output, shape index: {2}]
  %6 = xla_tuple %s3, %s4, %s5
  %s7 = sld [smem:[#allocation0]]
  $region73: #{tpu_custom_call.1} parent=0
    _
  %s9 = ssub.s32 1, %s7
  %s10 = scalar_select 0, %s9, %s7
  $region1: #{tpu_custom_call.1} parent=0
    #allocation2 [shape = 'u8[16384]{0}', space=vmem, size = 0x4000, scoped, tag = 'input window, operand 0']
    #allocation3 [shape = 's32[2]{0}', space=sflag, size = 0x8, scoped, tag = 'scoped memory for tpu_custom_call.1']
    #allocation4 [shape = 's32[2]{0}', space=sflag, size = 0x8, scoped, tag = 'scoped memory for tpu_custom_call.1']
    #allocation5 [shape = 'u8[8192]{0}', space=vmem, size = 0x2000, scoped, tag = 'input window, operand 1']
    #allocation6 [shape = 's32[2]{0}', space=sflag, size = 0x8, scoped, tag = 'scoped memory for tpu_custom_call.1']
    #allocation7 [shape = 'u8[8192]{0}', space=vmem, size = 0x2000, scoped, tag = 'input window, operand 2']
    #allocation8 [shape = 'u8[16384]{0}', space=vmem, size = 0x4000, scoped, tag = 'output window, operand 0']
    #allocation9 [shape = 'u8[16384]{0}', space=vmem, size = 0x4000, scoped, tag = 'output window, operand 1']
    #allocation10 [shape = 's32[2]{0}', space=sflag, size = 0x8, scoped, tag = 'scoped memory for tpu_custom_call.1']
    #allocation11 [shape = 'u8[16384]{0}', space=vmem, size = 0x4000, scoped, tag = 'output window, operand 2']
    %11 = vsyncpa [#allocation3], 0
    %s12 = scalar_lea.sflag [#allocation3], 1
    %13 = vsyncpa %s12, 0
    %14 = vsyncpa [#allocation6], 0
    %s15 = scalar_lea.sflag [#allocation6], 1
    %16 = vsyncpa %s15, 0
    %17 = vsyncpa [#allocation4], 0
    %s18 = scalar_lea.sflag [#allocation4], 1
    %19 = vsyncpa %s18, 0
    %20 = vsyncpa [#allocation10], 0
    %s21 = scalar_lea.sflag [#allocation10], 1
    %22 = vsyncpa %s21, 0
    loop: start=0, step=1, limit=6
    $region2: #{tpu_custom_call.1} parent=1 // loop_pre_header
      _
    $region3: #{tpu_custom_call.1} parent=1 // loop_header
      %s24 = sphi 0, %s28
      %p25 = scmp.ge.s32.totalorder %s24, 6
      %s31 = sphi 0, %s43
      %s32 = sphi 0, %s39
      %s33 = sphi 0, %s31
      %s34 = sphi 0, %s32
      %s35 = sphi 0, %s33
      %s36 = sphi 0, %s34
      %s48 = sphi 0, %s50
      %s51 = sphi 0, %s48
      %s52 = sphi 0, %s51
      %s68 = sphi 0, %s52
      %s84 = sphi 0, %s86
      %s87 = sphi 0, %s84
      %s88 = sphi 0, %s87
      %s104 = sphi 0, %s88
      %s120 = sphi 0, %s122
      %s123 = sphi 0, %s120
      %s124 = sphi 0, %s123
      %s140 = sphi 0, %s124
      %s148 = sphi 0, %s150
      %s151 = sphi 0, %s148
      %s152 = sphi 0, %s151
      %s168 = sphi 0, %s152
      %s176 = sphi 0, %s178
      %s179 = sphi 0, %s176
      %s180 = sphi 0, %s179
      %s196 = sphi 0, %s180
      %s204 = sphi 0, %s206
      %s207 = sphi 0, %s204
      %s208 = sphi 0, %s207
      %s224 = sphi 0, %s208
    $region4: #{tpu_custom_call.1} parent=1 // loop_header_branch
      %27 = sbr.rel (%p25) target = $region8
    $region5: #{tpu_custom_call.1} parent=1 // loop_body
      %s29 = ssub.s32 %s24, 1
      %s30 = ssub.s32 %s24, 2
      %s37 = sadd.s32 1, %s32
      %p38 = scmp.ge.s32.totalorder %s37, 2
      %s39 = scalar_select %p38, 0, %s37
      %s40 = sadd.s32 1, %s31
      %s41 = scalar_select %p38, %s40, %s31
      %p42 = scmp.ge.s32.totalorder %s41, 2
      %s43 = scalar_select %p42, 0, %s41
      %s44 = ssub.s32 %s31, %s43
      %s45 = ssub.s32 %s32, %s39
      %s46 = sor.u32 %s44, %s45
      %p47 = scmp.eq.s32.totalorder %s46, 0
      %s49 = sadd.s32 %s48, 1
      %s50 = scalar_select %p47, %s48, %s49
      %p53 = pneg %p47
      %p54 = scmp.eq.s32.totalorder %s24, 3
      %p55 = por %p53, %p54
      %p56 = scmp.ne.s32.totalorder %s48, %s51
      %p57 = scmp.eq.s32.totalorder %s24, 0
      %p58 = por %p56, %p57
      %p59 = scmp.ne.s32.totalorder %s48, %s51
      %p60 = scmp.eq.s32.totalorder %s29, 3
      %p61 = por %p59, %p60
      %p62 = scmp.ne.s32.totalorder %s51, %s52
      %p63 = scmp.eq.s32.totalorder %s29, 0
      %p64 = por %p62, %p63
      %p65 = scmp.ne.s32.totalorder %s51, %s52
      %p66 = scmp.eq.s32.totalorder %s30, 3
      %p67 = por %p65, %p66
      %p69 = scmp.ne.s32.totalorder %s52, %s68
      %p70 = scmp.eq.s32.totalorder %s30, 0
      %p71 = por %p69, %p70
      %s72 = smul.u32 %s32, 2
      %s73 = ssub.s32 %s72, 1
      %p74 = scmp.gt.s32.totalorder %s73, 0
      %s75 = scalar_select %p74, %s73, 0
      %s76 = smul.u32 %s39, 2
      %s77 = ssub.s32 %s76, 1
      %p78 = scmp.gt.s32.totalorder %s77, 0
      %s79 = scalar_select %p78, %s77, 0
      %s80 = ssub.s32 %s31, %s43
      %s81 = ssub.s32 %s75, %s79
      %s82 = sor.u32 %s80, %s81
      %p83 = scmp.eq.s32.totalorder %s82, 0
      %s85 = sadd.s32 %s84, 1
      %s86 = scalar_select %p83, %s84, %s85
      %p89 = pneg %p83
      %p90 = scmp.eq.s32.totalorder %s24, 3
      %p91 = por %p89, %p90
      %p92 = scmp.ne.s32.totalorder %s84, %s87
      %p93 = scmp.eq.s32.totalorder %s24, 0
      %p94 = por %p92, %p93
      %p95 = scmp.ne.s32.totalorder %s84, %s87
      %p96 = scmp.eq.s32.totalorder %s29, 3
      %p97 = por %p95, %p96
      %p98 = scmp.ne.s32.totalorder %s87, %s88
      %p99 = scmp.eq.s32.totalorder %s29, 0
      %p100 = por %p98, %p99
      %p101 = scmp.ne.s32.totalorder %s87, %s88
      %p102 = scmp.eq.s32.totalorder %s30, 3
      %p103 = por %p101, %p102
      %p105 = scmp.ne.s32.totalorder %s88, %s104
      %p106 = scmp.eq.s32.totalorder %s30, 0
      %p107 = por %p105, %p106
      %s108 = sadd.s32 %s32, 1
      %s109 = smul.u32 %s108, 2
      %p110 = scmp.lt.s32.totalorder %s109, 3
      %s111 = scalar_select %p110, %s109, 3
      %s112 = sadd.s32 %s39, 1
      %s113 = smul.u32 %s112, 2
      %p114 = scmp.lt.s32.totalorder %s113, 3
      %s115 = scalar_select %p114, %s113, 3
      %s116 = ssub.s32 %s31, %s43
      %s117 = ssub.s32 %s111, %s115
      %s118 = sor.u32 %s116, %s117
      %p119 = scmp.eq.s32.totalorder %s118, 0
      %s121 = sadd.s32 %s120, 1
      %s122 = scalar_select %p119, %s120, %s121
      %p125 = pneg %p119
      %p126 = scmp.eq.s32.totalorder %s24, 3
      %p127 = por %p125, %p126
      %p128 = scmp.ne.s32.totalorder %s120, %s123
      %p129 = scmp.eq.s32.totalorder %s24, 0
      %p130 = por %p128, %p129
      %p131 = scmp.ne.s32.totalorder %s120, %s123
      %p132 = scmp.eq.s32.totalorder %s29, 3
      %p133 = por %p131, %p132
      %p134 = scmp.ne.s32.totalorder %s123, %s124
      %p135 = scmp.eq.s32.totalorder %s29, 0
      %p136 = por %p134, %p135
      %p137 = scmp.ne.s32.totalorder %s123, %s124
      %p138 = scmp.eq.s32.totalorder %s30, 3
      %p139 = por %p137, %p138
      %p141 = scmp.ne.s32.totalorder %s124, %s140
      %p142 = scmp.eq.s32.totalorder %s30, 0
      %p143 = por %p141, %p142
      %s144 = ssub.s32 %s31, %s43
      %s145 = ssub.s32 %s32, %s39
      %s146 = sor.u32 %s144, %s145
      %p147 = scmp.eq.s32.totalorder %s146, 0
      %s149 = sadd.s32 %s148, 1
      %s150 = scalar_select %p147, %s148, %s149
      %p153 = pneg %p147
      %p154 = scmp.eq.s32.totalorder %s24, 3
      %p155 = por %p153, %p154
      %p156 = scmp.ne.s32.totalorder %s148, %s151
      %p157 = scmp.eq.s32.totalorder %s24, 0
      %p158 = por %p156, %p157
      %p159 = scmp.ne.s32.totalorder %s148, %s151
      %p160 = scmp.eq.s32.totalorder %s29, 3
      %p161 = por %p159, %p160
      %p162 = scmp.ne.s32.totalorder %s151, %s152
      %p163 = scmp.eq.s32.totalorder %s29, 0
      %p164 = por %p162, %p163
      %p165 = scmp.ne.s32.totalorder %s151, %s152
      %p166 = scmp.eq.s32.totalorder %s30, 3
      %p167 = por %p165, %p166
      %p169 = scmp.ne.s32.totalorder %s152, %s168
      %p170 = scmp.eq.s32.totalorder %s30, 0
      %p171 = por %p169, %p170
      %s172 = ssub.s32 %s31, %s43
      %s173 = ssub.s32 %s32, %s39
      %s174 = sor.u32 %s172, %s173
      %p175 = scmp.eq.s32.totalorder %s174, 0
      %s177 = sadd.s32 %s176, 1
      %s178 = scalar_select %p175, %s176, %s177
      %p181 = pneg %p175
      %p182 = scmp.eq.s32.totalorder %s24, 3
      %p183 = por %p181, %p182
      %p184 = scmp.ne.s32.totalorder %s176, %s179
      %p185 = scmp.eq.s32.totalorder %s24, 0
      %p186 = por %p184, %p185
      %p187 = scmp.ne.s32.totalorder %s176, %s179
      %p188 = scmp.eq.s32.totalorder %s29, 3
      %p189 = por %p187, %p188
      %p190 = scmp.ne.s32.totalorder %s179, %s180
      %p191 = scmp.eq.s32.totalorder %s29, 0
      %p192 = por %p190, %p191
      %p193 = scmp.ne.s32.totalorder %s179, %s180
      %p194 = scmp.eq.s32.totalorder %s30, 3
      %p195 = por %p193, %p194
      %p197 = scmp.ne.s32.totalorder %s180, %s196
      %p198 = scmp.eq.s32.totalorder %s30, 0
      %p199 = por %p197, %p198
      %s200 = ssub.s32 %s31, %s43
      %s201 = ssub.s32 %s32, %s39
      %s202 = sor.u32 %s200, %s201
      %p203 = scmp.eq.s32.totalorder %s202, 0
      %s205 = sadd.s32 %s204, 1
      %s206 = scalar_select %p203, %s204, %s205
      %p209 = pneg %p203
      %p210 = scmp.eq.s32.totalorder %s24, 3
      %p211 = por %p209, %p210
      %p212 = scmp.ne.s32.totalorder %s204, %s207
      %p213 = scmp.eq.s32.totalorder %s24, 0
      %p214 = por %p212, %p213
      %p215 = scmp.ne.s32.totalorder %s204, %s207
      %p216 = scmp.eq.s32.totalorder %s29, 3
      %p217 = por %p215, %p216
      %p218 = scmp.ne.s32.totalorder %s207, %s208
      %p219 = scmp.eq.s32.totalorder %s29, 0
      %p220 = por %p218, %p219
      %p221 = scmp.ne.s32.totalorder %s207, %s208
      %p222 = scmp.eq.s32.totalorder %s30, 3
      %p223 = por %p221, %p222
      %p225 = scmp.ne.s32.totalorder %s208, %s224
      %p226 = scmp.eq.s32.totalorder %s30, 0
      %p227 = por %p225, %p226
      %p228 = scmp.le.s32.totalorder 1, %s24
      %p229 = scmp.lt.s32.totalorder %s24, 5
      %p230 = pnand %p228, %p229
      %p231 = pneg %p230
      // Predicated region
      $region9: #{tpu_custom_call.1} parent=5 // pred_check
        _
      $region10: #{tpu_custom_call.1} parent=5 // pred_check_branch
        %233 = sbr.rel (%p230) target = $region12
      $region11: #{tpu_custom_call.1} parent=5 // pred_region
        %s234 = ssub.s32 %s24, 1
      $region12: #{tpu_custom_call.1} parent=5 // pred_fallthru
        _
      %p235 = scmp.lt.s32.totalorder %s24, 4
      // Predicated region
      $region13: #{tpu_custom_call.1} parent=5 // pred_check
        %p236 = pneg %p235
      $region14: #{tpu_custom_call.1} parent=5 // pred_check_branch
        %238 = sbr.rel (%p236) target = $region16
      $region15: #{tpu_custom_call.1} parent=5 // pred_region
        // Predicated region
        $region17: #{tpu_custom_call.1} parent=15 // pred_check
          %p239 = pneg %p58
        $region18: #{tpu_custom_call.1} parent=15 // pred_check_branch
          %241 = sbr.rel (%p239) target = $region20
        $region19: #{tpu_custom_call.1} parent=15 // pred_region
          %s242 = sand.u32 %s48, 1
          %s243 = scalar_lea.sflag [#allocation3], %s242
          %s244 = sand.u32 %s48, 1
          %s245 = smul.addr %s244, 16
          %s246 = scalar_lea.vmem [#allocation2], %s245
          %s247 = smul.u32 2, %s32
          %s249 = ssub.s32 256, 256
          %250 = vsyncadd %s243, %s249
          %s251 = smul.addr %s31, 4
          %s252 = sadd.s32 %s247, %s251
          %s253 = smul.addr %s252, 128
          %s254 = scalar_lea.hbm %s0, %s253
          %s255 = sshll.u32 %s246, 4
          %s256 = int_to_ptr.vmem [resolvable:$true] %s255
          %261 = dma.hbm_to_vmem [thread:$0]  %s254, 256, %s256, %s243, 128, 128, 8
        $region20: #{tpu_custom_call.1} parent=15 // pred_fallthru
          _
        // Predicated region
        $region21: #{tpu_custom_call.1} parent=15 // pred_check
          %p262 = pneg %p94
        $region22: #{tpu_custom_call.1} parent=15 // pred_check_branch
          %264 = sbr.rel (%p262) target = $region24
        $region23: #{tpu_custom_call.1} parent=15 // pred_region
          %s265 = sand.u32 %s24, 1
          %s266 = scalar_lea.sflag [#allocation6], %s265
          %s267 = sand.u32 %s84, 1
          %s268 = smul.addr %s267, 8
          %s269 = scalar_lea.vmem [#allocation5], %s268
          %s270 = smul.u32 %s32, 2
          %s271 = ssub.s32 %s270, 1
          %p272 = scmp.gt.s32.totalorder %s271, 0
          %s273 = scalar_select %p272, %s271, 0
          %s275 = ssub.s32 128, 128
          %276 = vsyncadd %s266, %s275
          %s277 = smul.addr %s31, 4
          %s278 = sadd.s32 %s273, %s277
          %s279 = smul.addr %s278, 128
          %s280 = scalar_lea.hbm %s1, %s279
          %s282 = sshll.u32 %s269, 4
          %s283 = int_to_ptr.vmem [resolvable:$true] %s282
          %285 = dma.hbm_to_vmem [thread:$0]  %s280, 128, %s283, %s266
        $region24: #{tpu_custom_call.1} parent=15 // pred_fallthru
          _
        // Predicated region
        $region25: #{tpu_custom_call.1} parent=15 // pred_check
          %p286 = pneg %p130
        $region26: #{tpu_custom_call.1} parent=15 // pred_check_branch
          %288 = sbr.rel (%p286) target = $region28
        $region27: #{tpu_custom_call.1} parent=15 // pred_region
          %s289 = sand.u32 %s24, 1
          %s290 = scalar_lea.sflag [#allocation6], %s289
          %s291 = sand.u32 %s120, 1
          %s292 = smul.addr %s291, 8
          %s293 = scalar_lea.vmem [#allocation7], %s292
          %s294 = sadd.s32 %s32, 1
          %s295 = smul.u32 %s294, 2
          %p296 = scmp.lt.s32.totalorder %s295, 3
          %s297 = scalar_select %p296, %s295, 3
          %s299 = ssub.s32 128, 128
          %300 = vsyncadd %s290, %s299
          %s301 = smul.addr %s31, 4
          %s302 = sadd.s32 %s297, %s301
          %s303 = smul.addr %s302, 128
          %s304 = scalar_lea.hbm %s2, %s303
          %s306 = sshll.u32 %s293, 4
          %s307 = int_to_ptr.vmem [resolvable:$true] %s306
          %309 = dma.hbm_to_vmem [thread:$0]  %s304, 128, %s307, %s290
        $region28: #{tpu_custom_call.1} parent=15 // pred_fallthru
          _
      $region16: #{tpu_custom_call.1} parent=5 // pred_fallthru
        _
      %p310 = scmp.le.s32.totalorder 1, %s24
      %p311 = scmp.lt.s32.totalorder %s24, 5
      %p312 = pnand %p310, %p311
      %p313 = pneg %p312
      // Predicated region
      $region29: #{tpu_custom_call.1} parent=5 // pred_check
        _
      $region30: #{tpu_custom_call.1} parent=5 // pred_check_branch
        %315 = sbr.rel (%p312) target = $region32
      $region31: #{tpu_custom_call.1} parent=5 // pred_region
        %s316 = ssub.s32 %s24, 1
        %s317 = sand.u32 %s51, 1
        %s318 = scalar_lea.sflag [#allocation3], %s317
        %s319 = sand.u32 %s51, 1
        %s320 = smul.addr %s319, 16
        %s321 = scalar_lea.vmem [#allocation2], %s320
        // Predicated region
        $region33: #{tpu_custom_call.1} parent=31 // pred_check
          %p322 = pneg %p64
        $region34: #{tpu_custom_call.1} parent=31 // pred_check_branch
          %324 = sbr.rel (%p322) target = $region36
        $region35: #{tpu_custom_call.1} parent=31 // pred_region
          %325 = dma.done %s318, 256
        $region36: #{tpu_custom_call.1} parent=31 // pred_fallthru
          _
        %s326 = sand.u32 %s29, 1
        %s327 = scalar_lea.sflag [#allocation6], %s326
        %s328 = sand.u32 %s87, 1
        %s329 = smul.addr %s328, 8
        %s330 = scalar_lea.vmem [#allocation5], %s329
        // Predicated region
        $region37: #{tpu_custom_call.1} parent=31 // pred_check
          %p331 = pneg %p100
        $region38: #{tpu_custom_call.1} parent=31 // pred_check_branch
          %333 = sbr.rel (%p331) target = $region40
        $region39: #{tpu_custom_call.1} parent=31 // pred_region
          %334 = dma.done %s327, 128
        $region40: #{tpu_custom_call.1} parent=31 // pred_fallthru
          _
        %s335 = sand.u32 %s29, 1
        %s336 = scalar_lea.sflag [#allocation6], %s335
        %s337 = sand.u32 %s123, 1
        %s338 = smul.addr %s337, 8
        %s339 = scalar_lea.vmem [#allocation7], %s338
        // Predicated region
        $region41: #{tpu_custom_call.1} parent=31 // pred_check
          %p340 = pneg %p136
        $region42: #{tpu_custom_call.1} parent=31 // pred_check_branch
          %342 = sbr.rel (%p340) target = $region44
        $region43: #{tpu_custom_call.1} parent=31 // pred_region
          %343 = dma.done %s336, 128
        $region44: #{tpu_custom_call.1} parent=31 // pred_fallthru
          _
        %s344 = sand.u32 %s51, 1
        %s345 = scalar_lea.sflag [#allocation3], %s344
        %s346 = sand.u32 %s51, 1
        %s347 = smul.addr %s346, 16
        %s348 = scalar_lea.vmem [#allocation2], %s347
        %p349 = pneg %p64
        %p350 = pneg %p61
        %s351 = sand.u32 %s29, 1
        %s352 = scalar_lea.sflag [#allocation6], %s351
        %s353 = sand.u32 %s87, 1
        %s354 = smul.addr %s353, 8
        %s355 = scalar_lea.vmem [#allocation5], %s354
        %p356 = pneg %p100
        %p357 = pneg %p97
        %s358 = sand.u32 %s29, 1
        %s359 = scalar_lea.sflag [#allocation6], %s358
        %s360 = sand.u32 %s123, 1
        %s361 = smul.addr %s360, 8
        %s362 = scalar_lea.vmem [#allocation7], %s361
        %p363 = pneg %p136
        %p364 = pneg %p133
        %p365 = pneg %p164
        %p366 = pneg %p161
        %s367 = sand.u32 %s151, 1
        %s368 = scalar_lea.sflag [#allocation4], %s367
        %s369 = sand.u32 %s151, 1
        %s370 = smul.addr %s369, 16
        %s371 = scalar_lea.vmem [#allocation8], %s370
        %p372 = pneg %p192
        %p373 = pneg %p189
        %s374 = sand.u32 %s29, 1
        %s375 = scalar_lea.sflag [#allocation10], %s374
        %s376 = sand.u32 %s179, 1
        %s377 = smul.addr %s376, 16
        %s378 = scalar_lea.vmem [#allocation9], %s377
        %p379 = pneg %p220
        %p380 = pneg %p217
        %s381 = sand.u32 %s29, 1
        %s382 = scalar_lea.sflag [#allocation10], %s381
        %s383 = sand.u32 %s207, 1
        %s384 = smul.addr %s383, 16
        %s385 = scalar_lea.vmem [#allocation11], %s384
        %s386 = smul.u32 2, %s34
        %s387 = smul.u32 %s34, 2
        %s388 = ssub.s32 %s387, 1
        %p389 = scmp.gt.s32.totalorder %s388, 0
        %s390 = scalar_select %p389, %s388, 0
        %s391 = sadd.s32 %s34, 1
        %s392 = smul.u32 %s391, 2
        %p393 = scmp.lt.s32.totalorder %s392, 3
        %s394 = scalar_select %p393, %s392, 3
        %s395 = smul.u32 2, %s34
        %s396 = smul.u32 2, %s34
        %s397 = smul.u32 2, %s34
        %v398 = vld [vmem:[%s321] sm:$0xff]
        %v399 = vld [vmem:[%s321 + $0x8] sm:$0xff]
        %p400 = scmp.gt.s32.totalorder %s34, 0
        %s401 = scalar_select %p400, 1, 0
        %s402 = scvt.s32.f32 %s401
        %v403 = vld [vmem:[%s330 + $0x7] sm:$0x1]
        %v404 = vstv %s402
        %v405 = vmul.f32 %v403, %v404
        %v406 = vld [vmem:[%s339] sm:$0x1]
        %407 = vrot.lane.b32.xlu0 %v398, 1
        %v408 = vpop.permute.xlu0 %407
        %409 = vrot.lane.b32.xlu0 %v399, 1
        %v410 = vpop.permute.xlu0 %409
        %411 = vrot.lane.b32.xlu0 %v398, 127
        %v412 = vpop.permute.xlu0 %411
        %413 = vrot.lane.b32.xlu0 %v399, 127
        %v414 = vpop.permute.xlu0 %413
        %v415 = vlaneseq
        %v416 = vand.u32 %v415, 127
        %vm417 = vcmp.gt.s32.totalorder %v416, 0
        %v418 = vsel %vm417, %v408, 0.0
        %v419 = vsel %vm417, %v410, 0.0
        %vm420 = vcmp.lt.s32.totalorder %v416, 127
        %v421 = vsel %vm420, %v412, 0.0
        %v422 = vsel %vm420, %v414, 0.0
        %v423 = vmul.f32 %v398, 2.0
        %v424 = vmul.f32 %v399, 2.0
        %v425 = vadd.f32 %v418, %v423
        %v426 = vadd.f32 %v419, %v424
        %v427 = vadd.f32 %v425, %v421
        %v428 = vadd.f32 %v426, %v422
        %v429 = vsub.f32 %v421, %v418
        %v430 = vsub.f32 %v422, %v419
        %431 = vrot.lane.b32.xlu0 %v405, 1
        %v432 = vpop.permute.xlu0 %431
        %433 = vrot.lane.b32.xlu0 %v405, 127
        %v434 = vpop.permute.xlu0 %433
        %v435 = vsel %vm417, %v432, 0.0
        %v436 = vsel %vm420, %v434, 0.0
        %v437 = vmul.f32 %v405, 2.0
        %v438 = vadd.f32 %v435, %v437
        %v439 = vadd.f32 %v438, %v436
        %v440 = vsub.f32 %v436, %v435
        %441 = vrot.lane.b32.xlu0 %v406, 1
        %v442 = vpop.permute.xlu0 %441
        %443 = vrot.lane.b32.xlu0 %v406, 127
        %v444 = vpop.permute.xlu0 %443
        %v445 = vsel %vm417, %v442, 0.0
        %v446 = vsel %vm420, %v444, 0.0
        %v447 = vmul.f32 %v406, 2.0
        %v448 = vadd.f32 %v445, %v447
        %v449 = vadd.f32 %v448, %v446
        %v450 = vsub.f32 %v446, %v445
        %v451 = vlaneseq
        %v452 = vshrl.u32 %v451, 7
        %v453 = vadd.s32 %v452, 8
        %s454 = smul.u32 %s34, 16
        %v455 = vstv %s454
        %v456 = vadd.s32 %v452, %v455
        %v457 = vadd.s32 %v453, %v455
        %vm458 = vcmp.eq.s32.totalorder %v452, 0
        %vm459 = vcmp.eq.s32.totalorder %v453, 0
        %vm460 = vcmp.eq.s32.totalorder %v452, 15
        %vm461 = vcmp.eq.s32.totalorder %v453, 15
        %vm462 = vcmp.lt.s32.totalorder %v456, 31
        %vm463 = vcmp.lt.s32.totalorder %v457, 31
        %v464 = vrot.slane %v427, 7
        %v465 = vrot.slane %v428, 7
        %vm466 = vcmp.lt.s32.totalorder %v452, 1
        %v467 = vsel %vm466, %v464, %v465
        %v468 = vsel %vm466, %v465, %v464
        %v469 = vlaneseq
        %v470 = vshrl.u32 %v469, 7
        %v471 = vsub.s32 0, %v470
        %v472 = vrot.slane %v439, %v471
        %v473 = vsel %vm458, %v472, %v468
        %v474 = vsel %vm459, %v472, %v467
        %v475 = vrot.slane %v429, 7
        %v476 = vrot.slane %v430, 7
        %v477 = vsel %vm466, %v475, %v476
        %v478 = vsel %vm466, %v476, %v475
        %v479 = vlaneseq
        %v480 = vshrl.u32 %v479, 7
        %v481 = vsub.s32 0, %v480
        %v482 = vrot.slane %v440, %v481
        %v483 = vsel %vm458, %v482, %v478
        %v484 = vsel %vm459, %v482, %v477
        %v485 = vrot.slane %v427, 1
        %v486 = vrot.slane %v428, 1
        %vm487 = vcmp.lt.s32.totalorder %v452, 7
        %v488 = vsel %vm487, %v485, %v486
        %v489 = vsel %vm487, %v486, %v485
        %v490 = vlaneseq
        %v491 = vshrl.u32 %v490, 7
        %v492 = vsub.s32 0, %v491
        %v493 = vrot.slane %v449, %v492
        %v494 = vsel %vm460, %v493, %v488
        %v495 = vsel %vm461, %v493, %v489
        %v496 = vrot.slane %v429, 1
        %v497 = vrot.slane %v430, 1
        %v498 = vsel %vm487, %v496, %v497
        %v499 = vsel %vm487, %v497, %v496
        %v500 = vlaneseq
        %v501 = vshrl.u32 %v500, 7
        %v502 = vsub.s32 0, %v501
        %v503 = vrot.slane %v450, %v502
        %v504 = vsel %vm460, %v503, %v498
        %v505 = vsel %vm461, %v503, %v499
        %v506 = vsel %vm462, %v494, 0.0
        %v507 = vsel %vm463, %v495, 0.0
        %v508 = vsel %vm462, %v504, 0.0
        %v509 = vsel %vm463, %v505, 0.0
        %v510 = vsub.f32 %v506, %v473
        %v511 = vsub.f32 %v507, %v474
        %v512 = vmul.f32 %v429, 2.0
        %v513 = vmul.f32 %v430, 2.0
        %v514 = vadd.f32 %v483, %v512
        %v515 = vadd.f32 %v484, %v513
        %v516 = vadd.f32 %v514, %v508
        %v517 = vadd.f32 %v515, %v509
        %518 = vst [vmem:[%s371] sm:$0xff] %v510
        %519 = vst [vmem:[%s371 + $0x8] sm:$0xff] %v511
        %520 = vst [vmem:[%s378] sm:$0xff] %v516
        %521 = vst [vmem:[%s378 + $0x8] sm:$0xff] %v517
        %v522 = vmul.f32 %v510, %v510
        %v523 = vmul.f32 %v511, %v511
        %v524 = vmul.f32 %v516, %v516
        %v525 = vmul.f32 %v517, %v517
        %v526 = vadd.f32 %v522, %v524
        %v527 = vadd.f32 %v523, %v525
        %v528 = vadd.f32 %v526, 1e-06
        %v529 = vadd.f32 %v527, 1e-06
        %v530 = vrsqrt.pop %v528
        %v531 = vmul.f32 %v528, %v530
        %vm532 = vcmp.eq.f32.partialorder %v528, inf
        %v533 = vsel %vm532, %v528, %v531
        %vm534 = vcmp.eq.f32.partialorder %v528, 0.0
        %v535 = vand.u32 %v528, 2147483648
        %v536 = vsel %vm534, %v535, %v533
        %v537 = vrsqrt.pop %v529
        %v538 = vmul.f32 %v529, %v537
        %vm539 = vcmp.eq.f32.partialorder %v529, inf
        %v540 = vsel %vm539, %v529, %v538
        %vm541 = vcmp.eq.f32.partialorder %v529, 0.0
        %v542 = vand.u32 %v529, 2147483648
        %v543 = vsel %vm541, %v542, %v540
        %544 = vst [vmem:[%s385] sm:$0xff] %v536
        %545 = vst [vmem:[%s385 + $0x8] sm:$0xff] %v543
        %s546 = sand.u32 %s151, 1
        %s547 = scalar_lea.sflag [#allocation4], %s546
        %s548 = sand.u32 %s151, 1
        %s549 = smul.addr %s548, 16
        %s550 = scalar_lea.vmem [#allocation8], %s549
        %s551 = sand.u32 %s29, 1
        %s552 = scalar_lea.sflag [#allocation10], %s551
        %s553 = sand.u32 %s179, 1
        %s554 = smul.addr %s553, 16
        %s555 = scalar_lea.vmem [#allocation9], %s554
        %s556 = sand.u32 %s29, 1
        %s557 = scalar_lea.sflag [#allocation10], %s556
        %s558 = sand.u32 %s207, 1
        %s559 = smul.addr %s558, 16
        %s560 = scalar_lea.vmem [#allocation11], %s559
        // Predicated region
        $region45: #{tpu_custom_call.1} parent=31 // pred_check
          %p561 = pneg %p161
        $region46: #{tpu_custom_call.1} parent=31 // pred_check_branch
          %563 = sbr.rel (%p561) target = $region48
        $region47: #{tpu_custom_call.1} parent=31 // pred_region
          %s564 = smul.u32 2, %s34
          %s566 = ssub.s32 256, 256
          %567 = vsyncadd %s547, %s566
          %s568 = smul.addr %s33, 4
          %s569 = sadd.s32 %s564, %s568
          %s570 = smul.addr %s569, 128
          %s571 = scalar_lea.hbm %s3, %s570
          %s572 = sshll.u32 %s550, 4
          %s573 = int_to_ptr.vmem [resolvable:$true] %s572
          %578 = dma.vmem_to_hbm [thread:$0]  %s573, 256, %s571, %s547, 128, 128, 8
        $region48: #{tpu_custom_call.1} parent=31 // pred_fallthru
          _
        // Predicated region
        $region49: #{tpu_custom_call.1} parent=31 // pred_check
          %p579 = pneg %p189
        $region50: #{tpu_custom_call.1} parent=31 // pred_check_branch
          %581 = sbr.rel (%p579) target = $region52
        $region51: #{tpu_custom_call.1} parent=31 // pred_region
          %s582 = smul.u32 2, %s34
          %s584 = ssub.s32 256, 256
          %585 = vsyncadd %s552, %s584
          %s586 = smul.addr %s33, 4
          %s587 = sadd.s32 %s582, %s586
          %s588 = smul.addr %s587, 128
          %s589 = scalar_lea.hbm %s4, %s588
          %s590 = sshll.u32 %s555, 4
          %s591 = int_to_ptr.vmem [resolvable:$true] %s590
          %596 = dma.vmem_to_hbm [thread:$0]  %s591, 256, %s589, %s552, 128, 128, 8
        $region52: #{tpu_custom_call.1} parent=31 // pred_fallthru
          _
        // Predicated region
        $region53: #{tpu_custom_call.1} parent=31 // pred_check
          %p597 = pneg %p217
        $region54: #{tpu_custom_call.1} parent=31 // pred_check_branch
          %599 = sbr.rel (%p597) target = $region56
        $region55: #{tpu_custom_call.1} parent=31 // pred_region
          %s600 = smul.u32 2, %s34
          %s602 = ssub.s32 256, 256
          %603 = vsyncadd %s557, %s602
          %s604 = smul.addr %s33, 4
          %s605 = sadd.s32 %s600, %s604
          %s606 = smul.addr %s605, 128
          %s607 = scalar_lea.hbm %s5, %s606
          %s608 = sshll.u32 %s560, 4
          %s609 = int_to_ptr.vmem [resolvable:$true] %s608
          %614 = dma.vmem_to_hbm [thread:$0]  %s609, 256, %s607, %s557, 128, 128, 8
        $region56: #{tpu_custom_call.1} parent=31 // pred_fallthru
          _
      $region32: #{tpu_custom_call.1} parent=5 // pred_fallthru
        _
      %p615 = scmp.le.s32.totalorder 2, %s24
      // Predicated region
      $region57: #{tpu_custom_call.1} parent=5 // pred_check
        %p616 = pneg %p615
      $region58: #{tpu_custom_call.1} parent=5 // pred_check_branch
        %618 = sbr.rel (%p616) target = $region60
      $region59: #{tpu_custom_call.1} parent=5 // pred_region
        %s619 = ssub.s32 %s24, 2
        // Predicated region
        $region61: #{tpu_custom_call.1} parent=59 // pred_check
          %p620 = pneg %p167
        $region62: #{tpu_custom_call.1} parent=59 // pred_check_branch
          %622 = sbr.rel (%p620) target = $region64
        $region63: #{tpu_custom_call.1} parent=59 // pred_region
          %s623 = sand.u32 %s152, 1
          %s624 = scalar_lea.sflag [#allocation4], %s623
          %s625 = sand.u32 %s152, 1
          %s626 = smul.addr %s625, 16
          %s627 = scalar_lea.vmem [#allocation8], %s626
          %628 = dma.done %s624, 256
        $region64: #{tpu_custom_call.1} parent=59 // pred_fallthru
          _
        // Predicated region
        $region65: #{tpu_custom_call.1} parent=59 // pred_check
          %p629 = pneg %p195
        $region66: #{tpu_custom_call.1} parent=59 // pred_check_branch
          %631 = sbr.rel (%p629) target = $region68
        $region67: #{tpu_custom_call.1} parent=59 // pred_region
          %s632 = sand.u32 %s30, 1
          %s633 = scalar_lea.sflag [#allocation10], %s632
          %s634 = sand.u32 %s180, 1
          %s635 = smul.addr %s634, 16
          %s636 = scalar_lea.vmem [#allocation9], %s635
          %637 = dma.done %s633, 256
        $region68: #{tpu_custom_call.1} parent=59 // pred_fallthru
          _
        // Predicated region
        $region69: #{tpu_custom_call.1} parent=59 // pred_check
          %p638 = pneg %p223
        $region70: #{tpu_custom_call.1} parent=59 // pred_check_branch
          %640 = sbr.rel (%p638) target = $region72
        $region71: #{tpu_custom_call.1} parent=59 // pred_region
          %s641 = sand.u32 %s30, 1
          %s642 = scalar_lea.sflag [#allocation10], %s641
          %s643 = sand.u32 %s208, 1
          %s644 = smul.addr %s643, 16
          %s645 = scalar_lea.vmem [#allocation11], %s644
          %646 = dma.done %s642, 256
        $region72: #{tpu_custom_call.1} parent=59 // pred_fallthru
          _
      $region60: #{tpu_custom_call.1} parent=5 // pred_fallthru
        _
    $region6: #{tpu_custom_call.1} parent=1 // loop_footer
      %s28 = sadd.s32 1, %s24
    $region7: #{tpu_custom_call.1} parent=1 // loop_footer_branch
      %23 = sbr.rel target = $region3
    $region8: #{tpu_custom_call.1} parent=1 // loop_exit
      _
    %647 = vsyncpa [#allocation3], 1
    %s648 = scalar_lea.sflag [#allocation3], 1
    %649 = vsyncpa %s648, 1
    %650 = vsyncpa [#allocation6], 1
    %s651 = scalar_lea.sflag [#allocation6], 1
    %652 = vsyncpa %s651, 1
    %653 = vsyncpa [#allocation4], 1
    %s654 = scalar_lea.sflag [#allocation4], 1
    %655 = vsyncpa %s654, 1
    %656 = vsyncpa [#allocation10], 1
    %s657 = scalar_lea.sflag [#allocation10], 1
    %658 = vsyncpa %s657, 1

</llo_original>
